<compile_context>
chip_gen: v6e
topology: v6e:2x2x1
jax: 0.10.0
libtpu: 0.0.40
codegen_flags: <defaults>
</compile_context>

<pallas_src>
import jax
import jax.numpy as jnp
from jax.experimental import pallas as pl
from jax.experimental.pallas import tpu as pltpu


def _round_up(x, m):
    return ((x + m - 1) // m) * m


_TM_CAP = 2048          # review item 1: amortize per-grid-step fixed overhead
_SMALL_N_TOKENS = 256   # review item 5: below this, pallas_call fixed cost dominates


# ---------------------------------------------------------------------------
# Kernel 1 (init-time, runs once): compose  T = tanh(emb @ W + b)
# ---------------------------------------------------------------------------
def _compose_table_kernel(emb_ref, w_ref, b_ref, t_ref):
    # emb_ref: (C_pad, E), w_ref: (E, O_pad), b_ref: (1, O_pad), t_ref: (C_pad, O_pad)
    acc = jnp.dot(emb_ref[...], w_ref[...], preferred_element_type=jnp.float32)
    t_ref[...] = jnp.tanh(acc + b_ref[...]).astype(t_ref.dtype)


def compose_table(emb_p, w_p, b_p):
    """emb_p: (C_pad, E), w_p: (E, O_pad), b_p: (1, O_pad) -> tanh(emb_p@w_p+b_p)."""
    C_pad, E = emb_p.shape
    O_pad = w_p.shape[1]
    return pl.pallas_call(
        _compose_table_kernel,
        out_shape=jax.ShapeDtypeStruct((C_pad, O_pad), jnp.float32),
        grid_spec=pltpu.PrefetchScalarGridSpec(
            num_scalar_prefetch=0,
            grid=(1,),
            in_specs=[
                pl.BlockSpec((C_pad, E), lambda i: (0, 0)),
                pl.BlockSpec((E, O_pad), lambda i: (0, 0)),
                pl.BlockSpec((1, O_pad), lambda i: (0, 0)),
            ],
            out_specs=pl.BlockSpec((C_pad, O_pad), lambda i: (0, 0)),
        ),
    )(emb_p, w_p, b_p)


# ---------------------------------------------------------------------------
# Kernel 2 (forward hot path): packed one-hot MXU gather of the composed table
# ---------------------------------------------------------------------------
def _packed_gather_kernel(idx_ref, tbl_ref, o_ref):
    # idx_ref: (tm, p) int32  -- p tokens packed per output row
    # tbl_ref: (p*C_pad, p*O) f32 -- slot s of class c at row s*C_pad+c, lanes [s*O,(s+1)*O)
    # o_ref  : (tm, p*O) f32
    tm, p = idx_ref.shape
    rows = tbl_ref.shape[0]
    c_pad = rows // p
    idx = idx_ref[...]
    col = jax.lax.broadcasted_iota(jnp.int32, (tm, rows), 1)
    hit = col == idx[:, 0:1]
    for s in range(1, p):  # p is a trace-time constant; fully unrolled
        hit = jnp.logical_or(hit, col == (idx[:, s:s + 1] + s * c_pad))
    # Exact selection: each output row sums exactly p disjoint table rows.
    o_ref[...] = jnp.dot(
        hit.astype(jnp.float32), tbl_ref[...], preferred_element_type=jnp.float32
    ).astype(o_ref.dtype)


def gather_packed(table2, idx_packed, *, tm):
    """table2: (p*C_pad, L) f32, idx_packed: (n_rows, p) int32 -> (n_rows, L) f32."""
    n_rows, _ = idx_packed.shape
    rows, lanes = table2.shape
    grid = (pl.cdiv(n_rows, tm),)  # partial last block is masked by Pallas
    return pl.pallas_call(
        _packed_gather_kernel,
        out_shape=jax.ShapeDtypeStruct((n_rows, lanes), jnp.float32),
        grid_spec=pltpu.PrefetchScalarGridSpec(
            num_scalar_prefetch=0,
            grid=grid,
            in_specs=[
                pl.BlockSpec((tm, idx_packed.shape[1]), lambda i: (i, 0)),
                pl.BlockSpec((rows, lanes), lambda i: (0, 0)),
            ],
            out_specs=pl.BlockSpec((tm, lanes), lambda i: (i, 0)),
        ),
        compiler_params=pltpu.CompilerParams(dimension_semantics=("parallel",)),
    )(idx_packed, table2)


def _pick_tile(n_rows):
    """Row tile for the gather grid (review items 1, 2, 6)."""
    n8 = _round_up(max(n_rows, 1), 8)
    if n8 <= 1024:
        # Single (or near-single) step; per-step overhead is the whole cost anyway.
        return n8
    # Large N: guarantee >= 2 'parallel' grid steps so both TensorCores get
    # work on v7x, while keeping steps <= _TM_CAP rows (VMEM is a non-issue).
    return min(_TM_CAP, _round_up(pl.cdiv(n8, 2), 8))


# ---------------------------------------------------------------------------
# Module wrapper
# ---------------------------------------------------------------------------
class SentimentEncoderPallas:
    """JAX/Pallas port of SentimentEncoder: tanh(Linear(Embedding(sentiment)))."""

    def __init__(self, num_sent_classes, sent_embedding_dim, sent_output_dim, key):
        k1, k2, k3 = jax.random.split(key, 3)
        # nn.Embedding(num_sent_classes, sent_embedding_dim, padding_idx=0):
        # N(0,1) init, row 0 zeroed because of padding_idx=0.
        emb = jax.random.normal(
            k1, (num_sent_classes, sent_embedding_dim), jnp.float32
        )
        self.embedding = emb.at[0].set(0.0)
        # nn.Linear(sent_embedding_dim, sent_output_dim): weight (O, E), bias (O).
        bound = 1.0 / (sent_embedding_dim ** 0.5)
        self.weight = jax.random.uniform(
            k2, (sent_output_dim, sent_embedding_dim), jnp.float32, -bound, bound
        )
        self.bias = jax.random.uniform(
            k3, (sent_output_dim,), jnp.float32, -bound, bound
        )
        self.num_sent_classes = num_sent_classes
        self.sent_output_dim = sent_output_dim

        # --- One-time composed class table T = tanh(E @ W^T + b). ----------
        C, E, O = num_sent_classes, sent_embedding_dim, sent_output_dim
        C_pad = _round_up(C, 8)
        O_pad = _round_up(O, 128)
        emb_p = jnp.zeros((C_pad, E), jnp.float32).at[:C].set(self.embedding)
        w_p = jnp.zeros((E, O_pad), jnp.float32).at[:, :O].set(self.weight.T)
        b_p = jnp.zeros((1, O_pad), jnp.float32).at[0, :O].set(self.bias)
        t_pad = compose_table(emb_p, w_p, b_p)          # (C_pad, O_pad), init-only
        t = t_pad[:C_pad, :O]                           # (C_pad, O)

        # Unpadded table for the tiny-N jnp.take fast path.
        self.table_small = t[:C]                        # (C, O)

        # Packed lane-dense table for the Pallas gather: p tokens per 128-lane
        # row (p = 2 when O = 64).  If O doesn't pack into 128 lanes we fall
        # back to p = 1 (masked stores, still minimal write volume).
        p = max(1, 128 // O)
        self._pack = p
        L = p * O
        table2 = jnp.zeros((p * C_pad, L), jnp.float32)
        for s in range(p):
            table2 = table2.at[s * C_pad:(s + 1) * C_pad, s * O:(s + 1) * O].set(t)
        self.table2 = table2                            # (p*C_pad, p*O)

    def __call__(self, sentiment, *, force_pallas=False):
        lead = sentiment.shape
        idx = sentiment.reshape(-1).astype(jnp.int32)
        N = int(idx.shape[0])
        O = self.sent_output_dim

        # Tiny-N fast path (review item 5): pallas_call fixed cost would be
        # the entire runtime; XLA's fused gather on the composed table wins.
        if N <= _SMALL_N_TOKENS and not force_pallas:
            return jnp.take(self.table_small, idx, axis=0).reshape(*lead, O)

        # --- Pallas packed-gather path -----------------------------------
        p = self._pack
        pad = (-N) % p
        if pad:
            idx = jnp.concatenate([idx, jnp.zeros((pad,), jnp.int32)])
        idx_packed = idx.reshape(-1, p)                 # free row-major reshape
        n_rows = idx_packed.shape[0]
        tm = _pick_tile(n_rows)
        packed = gather_packed(self.table2, idx_packed, tm=tm)  # (n_rows, p*O)
        out = packed.reshape(n_rows * p, O)             # free reinterpretation
        if pad:
            out = out[:N]
        return out.reshape(*lead, O)


if __name__ == "__main__":
    key = jax.random.PRNGKey(0)
    k_param, k_idx = jax.random.split(key)

    num_sent_classes = 8
    sent_embedding_dim = 32
    sent_output_dim = 64
    batch, seq = 2, 8

    model = SentimentEncoderPallas(
        num_sent_classes, sent_embedding_dim, sent_output_dim, k_param
    )

    def ref_fn(s):
        # Original module math: gather -> linear -> tanh (pure JAX reference).
        return jnp.tanh(
            jnp.take(model.embedding, s, axis=0) @ model.weight.T + model.bias
        )

    # Case 1: the module's demo shape, forced through the Pallas gather kernel.
    sentiment = jax.random.randint(
        k_idx, (batch, seq), minval=0, maxval=num_sent_classes, dtype=jnp.int32
    )
    out = jax.block_until_ready(model(sentiment, force_pallas=True))
    assert out.shape == (batch, seq, sent_output_dim), out.shape
    assert jnp.allclose(out, ref_fn(sentiment), atol=1e-5, rtol=1e-5), "mismatch (case 1)"

    # Case 2: larger even token count -> natural Pallas path, no pad/slice glue.
    s2 = jax.random.randint(
        jax.random.PRNGKey(1), (3, 200), 0, num_sent_classes, dtype=jnp.int32
    )
    o2 = jax.block_until_ready(model(s2))
    assert jnp.allclose(o2, ref_fn(s2), atol=1e-5, rtol=1e-5), "mismatch (case 2)"

    # Case 3: odd token count exercises the pack-padding tail + partial block.
    s3 = jax.random.randint(
        jax.random.PRNGKey(2), (1, 301), 0, num_sent_classes, dtype=jnp.int32
    )
    o3 = jax.block_until_ready(model(s3))
    assert jnp.allclose(o3, ref_fn(s3), atol=1e-5, rtol=1e-5), "mismatch (case 3)"

    # Case 4: tiny-N jnp.take fast path (no Pallas dispatch).
    o4 = jax.block_until_ready(model(sentiment))
    assert jnp.allclose(o4, ref_fn(sentiment), atol=1e-5, rtol=1e-5), "mismatch (case 4)"

    print("KERNEL_OK")
</pallas_src>

<mosaic_0001>
module attributes {stable_mosaic.version = 11 : i64} {
  func.func @_compose_table_kernel(%arg0: i32, %arg1: memref<8x32xf32, #tpu.memory_space<vmem>>, %arg2: memref<32x128xf32, #tpu.memory_space<vmem>>, %arg3: memref<1x128xf32, #tpu.memory_space<vmem>>, %arg4: memref<8x128xf32, #tpu.memory_space<vmem>>) attributes {dimension_semantics = [#tpu.dimension_semantics<arbitrary>], iteration_bounds = array<i64: 1>, scalar_prefetch = 0 : i64, scratch_operands = 0 : i64, tpu.core_type = #tpu.core_type<tc>, window_params = [{pipeline_mode = #tpu.pipeline_mode<synchronous>, transform_indices = @transform_0, window_bounds = array<i64: 8, 32>}, {pipeline_mode = #tpu.pipeline_mode<synchronous>, transform_indices = @transform_1, window_bounds = array<i64: 32, 128>}, {pipeline_mode = #tpu.pipeline_mode<synchronous>, transform_indices = @transform_2, window_bounds = array<i64: 1, 128>}, {pipeline_mode = #tpu.pipeline_mode<synchronous>, transform_indices = @transform_3, window_bounds = array<i64: 8, 128>}]} {
    %c0 = arith.constant 0 : index
    %c0_0 = arith.constant 0 : index
    %0 = vector.load %arg1[%c0, %c0_0] : memref<8x32xf32, #tpu.memory_space<vmem>>, vector<8x32xf32>
    %c0_1 = arith.constant 0 : index
    %c0_2 = arith.constant 0 : index
    %1 = vector.load %arg2[%c0_1, %c0_2] : memref<32x128xf32, #tpu.memory_space<vmem>>, vector<32x128xf32>
    %cst = arith.constant dense<0.000000e+00> : vector<8x128xf32>
    %2 = tpu.matmul %0, %1, %cst {dimension_numbers = #tpu.dot_dimension_numbers<[1], [0], [0], [1], [0, 0, 1, 1], [], []>} : vector<8x32xf32>, vector<32x128xf32>, vector<8x128xf32> -> vector<8x128xf32>
    %c0_3 = arith.constant 0 : index
    %c0_4 = arith.constant 0 : index
    %3 = vector.load %arg3[%c0_3, %c0_4] : memref<1x128xf32, #tpu.memory_space<vmem>>, vector<1x128xf32>
    %4 = vector.broadcast %3 : vector<1x128xf32> to vector<8x128xf32>
    %5 = arith.addf %2, %4 : vector<8x128xf32>
    %6 = math.tanh %5 : vector<8x128xf32>
    %c0_5 = arith.constant 0 : index
    %c0_6 = arith.constant 0 : index
    %7 = vector.load %arg4[%c0_5, %c0_6] : memref<8x128xf32, #tpu.memory_space<vmem>>, vector<8x128xf32>
    tpu.vector_store %arg4[%c0_5, %c0_6], %6 {strides = array<i32>} : memref<8x128xf32, #tpu.memory_space<vmem>>, vector<8x128xf32>,
    return
  }
  func.func @transform_0(%arg0: i32) -> (i32, i32) {
    %c0_i32 = arith.constant 0 : i32
    %c0_i32_0 = arith.constant 0 : i32
    %c0_i32_1 = arith.constant 0 : i32
    return %c0_i32, %c0_i32_0 : i32, i32
  }
  func.func @transform_1(%arg0: i32) -> (i32, i32) {
    %c0_i32 = arith.constant 0 : i32
    %c0_i32_0 = arith.constant 0 : i32
    %c0_i32_1 = arith.constant 0 : i32
    return %c0_i32, %c0_i32_0 : i32, i32
  }
  func.func @transform_2(%arg0: i32) -> (i32, i32) {
    %c0_i32 = arith.constant 0 : i32
    %c0_i32_0 = arith.constant 0 : i32
    %c0_i32_1 = arith.constant 0 : i32
    return %c0_i32, %c0_i32_0 : i32, i32
  }
  func.func @transform_3(%arg0: i32) -> (i32, i32) {
    %c0_i32 = arith.constant 0 : i32
    %c0_i32_0 = arith.constant 0 : i32
    %c0_i32_1 = arith.constant 0 : i32
    return %c0_i32, %c0_i32_0 : i32, i32
  }
}

</mosaic_0001>

<llo_original>
// kernel: tpu_custom_call.1
$region0: #{tpu_custom_call.1}
  #allocation0 [shape = 'u32[]', space=smem, size = 0x4, offset = 0x4, fixed_abs, tag = 'smem constant byte address 0x4 - core index']
  #allocation1 [shape = 'u32[144,128]{1,0:T(1,128)}', space=vmem, size = 0x12000, scoped, tag = 'internal scratch']
  %s0 = inlined_call_operand.hbm [shape: f32[8,32], index: 0, kind: input, shape index: {}]
  %s1 = inlined_call_operand.hbm [shape: f32[32,128], index: 1, kind: input, shape index: {}]
  %s2 = inlined_call_operand.vmem [shape: f32[1,128], index: 2, kind: input, shape index: {}]
  %s3 = inlined_call_operand.hbm [shape: f32[8,128], index: 3, kind: output, shape index: {}]
  %s4 = sld [smem:[#allocation0]]
  $region30: #{tpu_custom_call.1} parent=0
    _
  %s6 = ssub.s32 1, %s4
  %s7 = scalar_select 0, %s6, %s4
  $region1: #{tpu_custom_call.1} parent=0
    #allocation2 [shape = 'u8[4096]{0}', space=vmem, size = 0x1000, scoped, tag = 'input window, operand 0, single buffered']
    #allocation3 [shape = 's32[1]{0}', space=sflag, size = 0x4, scoped, tag = 'scoped memory for tpu_custom_call.1']
    #allocation4 [shape = 's32[1]{0}', space=sflag, size = 0x4, scoped, tag = 'scoped memory for tpu_custom_call.1']
    #allocation5 [shape = 'u8[16384]{0}', space=vmem, size = 0x4000, scoped, tag = 'input window, operand 1, single buffered']
    #allocation6 [shape = 's32[1]{0}', space=sflag, size = 0x4, scoped, tag = 'scoped memory for tpu_custom_call.1']
    #allocation7 [shape = 'u8[4096]{0}', space=vmem, size = 0x1000, scoped, tag = 'output window, operand 0, single buffered']
    %8 = vsyncpa [#allocation3], 0
    %9 = vsyncpa [#allocation6], 0
    %10 = vsyncpa [#allocation4], 0
    // Predicated region
    $region2: #{tpu_custom_call.1} parent=1 // pred_check
      _
    $region3: #{tpu_custom_call.1} parent=1 // pred_check_branch
      %12 = sbr.rel (0) target = $region5
    $region4: #{tpu_custom_call.1} parent=1 // pred_region
      %s14 = ssub.s32 128, 128
      %15 = vsyncadd [#allocation3], %s14
      %s17 = sshll.u32 [#allocation2], 4
      %s18 = int_to_ptr.vmem [resolvable:$true] %s17
      %20 = dma.hbm_to_vmem [thread:$0]  %s0, 128, %s18, [#allocation3]
    $region5: #{tpu_custom_call.1} parent=1 // pred_fallthru
      _
    // Predicated region
    $region6: #{tpu_custom_call.1} parent=1 // pred_check
      _
    $region7: #{tpu_custom_call.1} parent=1 // pred_check_branch
      %22 = sbr.rel (0) target = $region9
    $region8: #{tpu_custom_call.1} parent=1 // pred_region
      %s24 = ssub.s32 512, 512
      %25 = vsyncadd [#allocation6], %s24
      %s26 = sshll.u32 [#allocation5], 4
      %s27 = int_to_ptr.vmem [resolvable:$true] %s26
      %32 = dma.hbm_to_vmem [thread:$0]  %s1, 512, %s27, [#allocation6], 128, 128, 8
    $region9: #{tpu_custom_call.1} parent=1 // pred_fallthru
      _
    // Predicated region
    $region10: #{tpu_custom_call.1} parent=1 // pred_check
      _
    $region11: #{tpu_custom_call.1} parent=1 // pred_check_branch
      %34 = sbr.rel (0) target = $region13
    $region12: #{tpu_custom_call.1} parent=1 // pred_region
      _
    $region13: #{tpu_custom_call.1} parent=1 // pred_fallthru
      _
    // Predicated region
    $region14: #{tpu_custom_call.1} parent=1 // pred_check
      _
    $region15: #{tpu_custom_call.1} parent=1 // pred_check_branch
      %36 = sbr.rel (0) target = $region17
    $region16: #{tpu_custom_call.1} parent=1 // pred_region
      %37 = dma.done [#allocation3], 128
    $region17: #{tpu_custom_call.1} parent=1 // pred_fallthru
      _
    // Predicated region
    $region18: #{tpu_custom_call.1} parent=1 // pred_check
      _
    $region19: #{tpu_custom_call.1} parent=1 // pred_check_branch
      %39 = sbr.rel (0) target = $region21
    $region20: #{tpu_custom_call.1} parent=1 // pred_region
      %40 = dma.done [#allocation6], 512
    $region21: #{tpu_custom_call.1} parent=1 // pred_fallthru
      _
    %v41 = vld [vmem:[#allocation2] sm:$0xff]
    %v42 = vld [vmem:[#allocation5] sm:$0xff]
    %v43 = vld [vmem:[#allocation5 + $0x8] sm:$0xff]
    %v44 = vld [vmem:[#allocation5 + $0x10] sm:$0xff]
    %v45 = vld [vmem:[#allocation5 + $0x18] sm:$0xff]
    %v46 = vld [vmem:[%s2] sm:$0x1]
    %v48 = vlaneseq
    %v49 = vshrl.u32 %v48, 7
    %v50 = vsub.s32 0, %v49
    %v51 = vrot.slane %v46, %v50
    %vm53 = vcmask 261120
    %v55 = vsel %vm53, %v41, 0
    %57 = vmatprep.subr.mxu0 0.0
    %58 = vmatpush1.msra.mxu0 0.0
    %59 = vmatprep.subr.mxu0 0.0
    %60 = vmatpush1.msra.mxu0 0.0
    %61 = vmatprep.subr.mxu0 0.0
    %62 = vmatpush1.msra.mxu0 0.0
    %63 = vmatprep.subr.mxu0 0.0
    %64 = vmatpush1.msra.mxu0 0.0
    %65 = vmatprep.subr.mxu0 0.0
    %66 = vmatpush1.msra.mxu0 0.0
    %67 = vmatprep.subr.mxu0 0.0
    %68 = vmatpush1.msra.mxu0 0.0
    %69 = vmatprep.subr.mxu0 0.0
    %70 = vmatpush1.msra.mxu0 0.0
    %71 = vmatprep.subr.mxu0 0.0
    %72 = vmatpush1.msra.mxu0 0.0
    %73 = vmatprep.subr.mxu0 0.0
    %74 = vmatpush1.msra.mxu0 0.0
    %75 = vmatprep.subr.mxu0 0.0
    %76 = vmatpush1.msra.mxu0 0.0
    %77 = vmatprep.subr.mxu0 0.0
    %78 = vmatpush1.msra.mxu0 0.0
    %79 = vmatprep.subr.mxu0 0.0
    %80 = vmatpush1.msra.mxu0 0.0
    %81 = vmatprep.subr.mxu0 0.0
    %82 = vmatpush1.msra.mxu0 %v45
    %83 = vmatprep.subr.mxu0 0.0
    %84 = vmatpush1.msra.mxu0 %v44
    %85 = vmatprep.subr.mxu0 0.0
    %86 = vmatpush1.msra.mxu0 %v43
    %87 = vmatprep.subr.mxu0 0.0
    %88 = vmatpush1.msra.mxu0 %v42
    %89 = vmatprep.subr.mxu0 0.0
    %90 = vmatpush2.msra.mxu0 0.0
    %91 = vmatprep.subr.mxu0 0.0
    %92 = vmatpush2.msra.mxu0 0.0
    %93 = vmatprep.subr.mxu0 0.0
    %94 = vmatpush2.msra.mxu0 0.0
    %95 = vmatprep.subr.mxu0 0.0
    %96 = vmatpush2.msra.mxu0 0.0
    %97 = vmatprep.subr.mxu0 0.0
    %98 = vmatpush2.msra.mxu0 0.0
    %99 = vmatprep.subr.mxu0 0.0
    %100 = vmatpush2.msra.mxu0 0.0
    %101 = vmatprep.subr.mxu0 0.0
    %102 = vmatpush2.msra.mxu0 0.0
    %103 = vmatprep.subr.mxu0 0.0
    %104 = vmatpush2.msra.mxu0 0.0
    %105 = vmatprep.subr.mxu0 0.0
    %106 = vmatpush2.msra.mxu0 0.0
    %107 = vmatprep.subr.mxu0 0.0
    %108 = vmatpush2.msra.mxu0 0.0
    %109 = vmatprep.subr.mxu0 0.0
    %110 = vmatpush2.msra.mxu0 0.0
    %111 = vmatprep.subr.mxu0 0.0
    %112 = vmatpush2.msra.mxu0 0.0
    %113 = vmatprep.subr.mxu0 0.0
    %114 = vmatpush2.msra.mxu0 0.0
    %115 = vmatprep.subr.mxu0 0.0
    %116 = vmatpush2.msra.mxu0 0.0
    %117 = vmatprep.subr.mxu0 0.0
    %118 = vmatpush2.msra.mxu0 0.0
    %119 = vmatprep.subr.mxu0 0.0
    %120 = vmatpush2.msra.mxu0 0.0
    %121 = vmatprep.mubr.f32.mxu0 0.0
    %122 = vmatmul.mubr.f32.gmra.mxu0 %v55
    %v123 = vpop.f32.mrf.mxu0
    %v124 = vadd.f32 %v51, %v123
    %v125 = vpop.f32.mrf.mxu0
    %126 = vdwg.mxu0
    %v127 = vtanh.pop %v124
    %128 = vst [vmem:[#allocation7] sm:$0xff] %v127
    // Predicated region
    $region22: #{tpu_custom_call.1} parent=1 // pred_check
      _
    $region23: #{tpu_custom_call.1} parent=1 // pred_check_branch
      %130 = sbr.rel (0) target = $region25
    $region24: #{tpu_custom_call.1} parent=1 // pred_region
      %s132 = ssub.s32 128, 128
      %133 = vsyncadd [#allocation4], %s132
      %s135 = sshll.u32 [#allocation7], 4
      %s136 = int_to_ptr.vmem [resolvable:$true] %s135
      %138 = dma.vmem_to_hbm [thread:$0]  %s136, 128, %s3, [#allocation4]
    $region25: #{tpu_custom_call.1} parent=1 // pred_fallthru
      _
    // Predicated region
    $region26: #{tpu_custom_call.1} parent=1 // pred_check
      _
    $region27: #{tpu_custom_call.1} parent=1 // pred_check_branch
      %140 = sbr.rel (0) target = $region29
    $region28: #{tpu_custom_call.1} parent=1 // pred_region
      %141 = dma.done [#allocation4], 128
    $region29: #{tpu_custom_call.1} parent=1 // pred_fallthru
      _
    %142 = vsyncpa [#allocation3], 1
    %143 = vsyncpa [#allocation6], 1
    %144 = vsyncpa [#allocation4], 1

</llo_original>
